<compile_context>
chip_gen: v6e
topology: v6e:2x2x1
jax: 0.10.0
libtpu: 0.0.40
codegen_flags: <defaults>
</compile_context>

<pallas_src>
import jax
import jax.numpy as jnp
from jax.experimental import pallas as pl
from jax.experimental.pallas import tpu as pltpu


def _ig_critic_kernel(x_ref, w1_ref, b1_ref, w2_ref, b2_ref, w3_ref, b3_ref,
                      w4_ref, b4_ref, q_ref):
    """Full 4-layer MLP for one batch tile; all weights resident in VMEM."""
    cdt = w1_ref.dtype                      # compute dtype of the matmuls

    x = x_ref[...]                                                   # (TB, D_in)

    h = jnp.dot(x, w1_ref[...], preferred_element_type=jnp.float32) + b1_ref[...]
    h = jnp.maximum(h, 0.0).astype(cdt)                              # (TB, 32)

    h = jnp.dot(h, w2_ref[...], preferred_element_type=jnp.float32) + b2_ref[...]
    h = jnp.maximum(h, 0.0).astype(cdt)                              # (TB, 32)

    h = jnp.dot(h, w3_ref[...], preferred_element_type=jnp.float32) + b3_ref[...]
    h = jnp.maximum(h, 0.0).astype(cdt)                              # (TB, 32)

    q_ref[...] = (jnp.dot(h, w4_ref[...], preferred_element_type=jnp.float32)
                  + b4_ref[...]).astype(q_ref.dtype)                 # (TB, n_actions)


def _round_up(x, m):
    return ((x + m - 1) // m) * m


def prepare_params(params, *, compute_dtype=jnp.bfloat16):
    """One-time weight prep (hoisted out of the forward pass).

    Weights are transposed to (in_features, out_features) and cast to the
    matmul compute dtype; biases stay f32 (bias-add/ReLU run in f32).
    """
    def wt(name):
        return jnp.asarray(params[name].T, compute_dtype)

    def b(name):
        return jnp.asarray(params[name], jnp.float32).reshape(1, -1)

    return {
        "w1t": wt("w1"), "b1": b("b1"),
        "w2t": wt("w2"), "b2": b("b2"),
        "w3t": wt("w3"), "b3": b("b3"),
        "w4t": wt("w4"), "b4": b("b4"),
    }


def _choose_tiling(B, *, row_unit, max_tile_rows=2048):
    """Pick (tile_b, B_pad).

    B < 128: one full-array tile (no padding, exempt from (8,128) rule).
    B >= 128: >= 2 tiles so v7x can shard across both TensorCores; prefer a
    tile count that divides the row_unit-rounded batch exactly (no input
    pad-copy); cap tiles at `max_tile_rows` rows.
    """
    if B < 128:
        return B, B
    units = -(-B // row_unit)                                  # ceil
    min_tiles = max(2, -(-units * row_unit // max_tile_rows))
    for n in range(min_tiles, min(units, min_tiles + 16) + 1):
        if units % n == 0:
            tile_b = (units // n) * row_unit
            return tile_b, units * row_unit
    # fallback: minimal padding of the last tile
    tile_b = -(-units // min_tiles) * row_unit
    return tile_b, _round_up(units * row_unit, tile_b)


def ig_critic_forward(inputs, prepared, *, tile_b=None):
    """inputs: (B, D_in) float32; prepared: output of prepare_params().
    Returns q: (B, n_actions) float32."""
    B, D_in = inputs.shape
    H = prepared["w1t"].shape[1]                 # 32
    n_actions = prepared["w4t"].shape[1]
    cdt = prepared["w1t"].dtype
    row_unit = 8 if cdt == jnp.float32 else 16   # sublane packing of cdt

    if tile_b is None:
        tile_b, B_pad = _choose_tiling(B, row_unit=row_unit)
    else:
        B_pad = _round_up(B, tile_b)
        if tile_b != B_pad:                      # multi-tile: sublane rule applies
            assert tile_b % row_unit == 0, (
                f"batch tile ({tile_b}) must be a multiple of {row_unit} rows")

    x = inputs.astype(cdt)                       # halves input HBM bytes for bf16
    if B_pad != B:
        x = jnp.pad(x, ((0, B_pad - B), (0, 0)))

    grid = (B_pad // tile_b,)
    batch_map = lambda i: (i, 0)
    fixed_map = lambda i: (0, 0)                 # same block every step -> single DMA

    q = pl.pallas_call(
        _ig_critic_kernel,
        out_shape=jax.ShapeDtypeStruct((B_pad, n_actions), jnp.float32),
        grid_spec=pltpu.PrefetchScalarGridSpec(
            num_scalar_prefetch=0,
            grid=grid,
            in_specs=[
                pl.BlockSpec((tile_b, D_in), batch_map),     # inputs
                pl.BlockSpec((D_in, H), fixed_map),          # fc1 W^T (full array)
                pl.BlockSpec((1, H), fixed_map),             # fc1 b
                pl.BlockSpec((H, H), fixed_map),             # fc2 W^T
                pl.BlockSpec((1, H), fixed_map),             # fc2 b
                pl.BlockSpec((H, H), fixed_map),             # fc3 W^T
                pl.BlockSpec((1, H), fixed_map),             # fc3 b
                pl.BlockSpec((H, n_actions), fixed_map),     # fc4 W^T
                pl.BlockSpec((1, n_actions), fixed_map),     # fc4 b
            ],
            out_specs=pl.BlockSpec((tile_b, n_actions), batch_map),
        ),
        compiler_params=pltpu.CompilerParams(
            dimension_semantics=("parallel",)),
    )(x, prepared["w1t"], prepared["b1"], prepared["w2t"], prepared["b2"],
      prepared["w3t"], prepared["b3"], prepared["w4t"], prepared["b4"])

    return q if B_pad == B else q[:B]


def init_params(key, input_shape, n_actions, hidden=32):
    """Deterministic synthetic params (PyTorch Linear uniform fan-in init)."""
    ks = jax.random.split(key, 8)

    def u(k, shape, fan_in):
        bound = 1.0 / jnp.sqrt(fan_in)
        return jax.random.uniform(k, shape, jnp.float32, -bound, bound)

    H = hidden
    return {
        "w1": u(ks[0], (H, input_shape), input_shape),
        "b1": u(ks[1], (H,), input_shape),
        "w2": u(ks[2], (H, H), H),
        "b2": u(ks[3], (H,), H),
        "w3": u(ks[4], (H, H), H),
        "b3": u(ks[5], (H,), H),
        "w4": u(ks[6], (n_actions, H), H),
        "b4": u(ks[7], (n_actions,), H),
    }


def _reference_forward(inputs, params):
    """Pure-JAX f32 reference of the PyTorch forward, for correctness checking."""
    x = jnp.maximum(inputs @ params["w1"].T + params["b1"], 0.0)
    x = jnp.maximum(x @ params["w2"].T + params["b2"], 0.0)
    x = jnp.maximum(x @ params["w3"].T + params["b3"], 0.0)
    return x @ params["w4"].T + params["b4"]


if __name__ == "__main__":
    INPUT_SHAPE = 80   # per-agent critic input feature size
    N_ACTIONS = 9      # args.n_actions
    BATCH = 64

    key = jax.random.PRNGKey(0)
    k_x, k_p = jax.random.split(key, 2)
    inputs = jax.random.normal(k_x, (BATCH, INPUT_SHAPE), jnp.float32)
    params = init_params(k_p, INPUT_SHAPE, N_ACTIONS)
    q_ref = _reference_forward(inputs, params)

    # 1) Exact-semantics check: f32 compute path, default (single-tile) tiling.
    prep_f32 = prepare_params(params, compute_dtype=jnp.float32)
    q_f32 = jax.block_until_ready(ig_critic_forward(inputs, prep_f32))
    assert q_f32.shape == (BATCH, N_ACTIONS)
    assert jnp.allclose(q_f32, q_ref, atol=1e-5, rtol=1e-5)

    # 2) Optimized bf16 path, default tiling (grid=(1,), one full-array tile).
    prep_bf16 = prepare_params(params)          # compute_dtype=bf16
    q_bf = jax.block_until_ready(ig_critic_forward(inputs, prep_bf16))
    assert q_bf.shape == (BATCH, N_ACTIONS)
    assert jnp.allclose(q_bf, q_ref, atol=7.5e-2, rtol=7.5e-2)

    # 3) Optimized bf16 path, explicit tile_b=32 -> grid=(2,), exercising the
    #    multi-tile "parallel" path (shards across both TCs on v7x).
    q_bf2 = jax.block_until_ready(ig_critic_forward(inputs, prep_bf16, tile_b=32))
    assert q_bf2.shape == (BATCH, N_ACTIONS)
    assert jnp.allclose(q_bf2, q_ref, atol=7.5e-2, rtol=7.5e-2)

    print("KERNEL_OK")
</pallas_src>

<mosaic_0001>
module attributes {stable_mosaic.version = 11 : i64} {
  func.func @_ig_critic_kernel(%arg0: i32, %arg1: memref<64x80xf32, #tpu.memory_space<vmem>>, %arg2: memref<80x32xf32, #tpu.memory_space<vmem>>, %arg3: memref<1x32xf32, #tpu.memory_space<vmem>>, %arg4: memref<32x32xf32, #tpu.memory_space<vmem>>, %arg5: memref<1x32xf32, #tpu.memory_space<vmem>>, %arg6: memref<32x32xf32, #tpu.memory_space<vmem>>, %arg7: memref<1x32xf32, #tpu.memory_space<vmem>>, %arg8: memref<32x9xf32, #tpu.memory_space<vmem>>, %arg9: memref<1x9xf32, #tpu.memory_space<vmem>>, %arg10: memref<64x9xf32, #tpu.memory_space<vmem>>) attributes {dimension_semantics = [#tpu.dimension_semantics<parallel>], iteration_bounds = array<i64: 1>, scalar_prefetch = 0 : i64, scratch_operands = 0 : i64, tpu.core_type = #tpu.core_type<tc>, window_params = [{transform_indices = @transform_0, window_bounds = array<i64: 64, 80>}, {pipeline_mode = #tpu.pipeline_mode<synchronous>, transform_indices = @transform_1, window_bounds = array<i64: 80, 32>}, {pipeline_mode = #tpu.pipeline_mode<synchronous>, transform_indices = @transform_2, window_bounds = array<i64: 1, 32>}, {pipeline_mode = #tpu.pipeline_mode<synchronous>, transform_indices = @transform_3, window_bounds = array<i64: 32, 32>}, {pipeline_mode = #tpu.pipeline_mode<synchronous>, transform_indices = @transform_4, window_bounds = array<i64: 1, 32>}, {pipeline_mode = #tpu.pipeline_mode<synchronous>, transform_indices = @transform_5, window_bounds = array<i64: 32, 32>}, {pipeline_mode = #tpu.pipeline_mode<synchronous>, transform_indices = @transform_6, window_bounds = array<i64: 1, 32>}, {pipeline_mode = #tpu.pipeline_mode<synchronous>, transform_indices = @transform_7, window_bounds = array<i64: 32, 9>}, {pipeline_mode = #tpu.pipeline_mode<synchronous>, transform_indices = @transform_8, window_bounds = array<i64: 1, 9>}, {transform_indices = @transform_9, window_bounds = array<i64: 64, 9>}]} {
    %c0 = arith.constant 0 : index
    %c0_0 = arith.constant 0 : index
    %0 = vector.load %arg1[%c0, %c0_0] : memref<64x80xf32, #tpu.memory_space<vmem>>, vector<64x80xf32>
    %c0_1 = arith.constant 0 : index
    %c0_2 = arith.constant 0 : index
    %1 = vector.load %arg2[%c0_1, %c0_2] : memref<80x32xf32, #tpu.memory_space<vmem>>, vector<80x32xf32>
    %cst = arith.constant dense<0.000000e+00> : vector<64x32xf32>
    %2 = tpu.matmul %0, %1, %cst {dimension_numbers = #tpu.dot_dimension_numbers<[1], [0], [0], [1], [0, 0, 1, 1], [], []>} : vector<64x80xf32>, vector<80x32xf32>, vector<64x32xf32> -> vector<64x32xf32>
    %c0_3 = arith.constant 0 : index
    %c0_4 = arith.constant 0 : index
    %3 = vector.load %arg3[%c0_3, %c0_4] : memref<1x32xf32, #tpu.memory_space<vmem>>, vector<1x32xf32>
    %4 = vector.broadcast %3 : vector<1x32xf32> to vector<64x32xf32>
    %5 = arith.addf %2, %4 : vector<64x32xf32>
    %cst_5 = arith.constant 0.000000e+00 : f32
    %6 = vector.broadcast %cst_5 : f32 to vector<64x32xf32>
    %7 = arith.maximumf %5, %6 : vector<64x32xf32>
    %c0_6 = arith.constant 0 : index
    %c0_7 = arith.constant 0 : index
    %8 = vector.load %arg4[%c0_6, %c0_7] : memref<32x32xf32, #tpu.memory_space<vmem>>, vector<32x32xf32>
    %cst_8 = arith.constant dense<0.000000e+00> : vector<64x32xf32>
    %9 = tpu.matmul %7, %8, %cst_8 {dimension_numbers = #tpu.dot_dimension_numbers<[1], [0], [0], [1], [0, 0, 1, 1], [], []>} : vector<64x32xf32>, vector<32x32xf32>, vector<64x32xf32> -> vector<64x32xf32>
    %c0_9 = arith.constant 0 : index
    %c0_10 = arith.constant 0 : index
    %10 = vector.load %arg5[%c0_9, %c0_10] : memref<1x32xf32, #tpu.memory_space<vmem>>, vector<1x32xf32>
    %11 = vector.broadcast %10 : vector<1x32xf32> to vector<64x32xf32>
    %12 = arith.addf %9, %11 : vector<64x32xf32>
    %cst_11 = arith.constant 0.000000e+00 : f32
    %13 = vector.broadcast %cst_11 : f32 to vector<64x32xf32>
    %14 = arith.maximumf %12, %13 : vector<64x32xf32>
    %c0_12 = arith.constant 0 : index
    %c0_13 = arith.constant 0 : index
    %15 = vector.load %arg6[%c0_12, %c0_13] : memref<32x32xf32, #tpu.memory_space<vmem>>, vector<32x32xf32>
    %cst_14 = arith.constant dense<0.000000e+00> : vector<64x32xf32>
    %16 = tpu.matmul %14, %15, %cst_14 {dimension_numbers = #tpu.dot_dimension_numbers<[1], [0], [0], [1], [0, 0, 1, 1], [], []>} : vector<64x32xf32>, vector<32x32xf32>, vector<64x32xf32> -> vector<64x32xf32>
    %c0_15 = arith.constant 0 : index
    %c0_16 = arith.constant 0 : index
    %17 = vector.load %arg7[%c0_15, %c0_16] : memref<1x32xf32, #tpu.memory_space<vmem>>, vector<1x32xf32>
    %18 = vector.broadcast %17 : vector<1x32xf32> to vector<64x32xf32>
    %19 = arith.addf %16, %18 : vector<64x32xf32>
    %cst_17 = arith.constant 0.000000e+00 : f32
    %20 = vector.broadcast %cst_17 : f32 to vector<64x32xf32>
    %21 = arith.maximumf %19, %20 : vector<64x32xf32>
    %c0_18 = arith.constant 0 : index
    %c0_19 = arith.constant 0 : index
    %22 = vector.load %arg8[%c0_18, %c0_19] : memref<32x9xf32, #tpu.memory_space<vmem>>, vector<32x9xf32>
    %cst_20 = arith.constant dense<0.000000e+00> : vector<64x9xf32>
    %23 = tpu.matmul %21, %22, %cst_20 {dimension_numbers = #tpu.dot_dimension_numbers<[1], [0], [0], [1], [0, 0, 1, 1], [], []>} : vector<64x32xf32>, vector<32x9xf32>, vector<64x9xf32> -> vector<64x9xf32>
    %c0_21 = arith.constant 0 : index
    %c0_22 = arith.constant 0 : index
    %24 = vector.load %arg9[%c0_21, %c0_22] : memref<1x9xf32, #tpu.memory_space<vmem>>, vector<1x9xf32>
    %25 = vector.broadcast %24 : vector<1x9xf32> to vector<64x9xf32>
    %26 = arith.addf %23, %25 : vector<64x9xf32>
    %c0_23 = arith.constant 0 : index
    %c0_24 = arith.constant 0 : index
    %27 = vector.load %arg10[%c0_23, %c0_24] : memref<64x9xf32, #tpu.memory_space<vmem>>, vector<64x9xf32>
    tpu.vector_store %arg10[%c0_23, %c0_24], %26 {strides = array<i32>} : memref<64x9xf32, #tpu.memory_space<vmem>>, vector<64x9xf32>,
    return
  }
  func.func @transform_0(%arg0: i32) -> (i32, i32) {
    %c0_i32 = arith.constant 0 : i32
    %c0_i32_0 = arith.constant 0 : i32
    return %arg0, %c0_i32 : i32, i32
  }
  func.func @transform_1(%arg0: i32) -> (i32, i32) {
    %c0_i32 = arith.constant 0 : i32
    %c0_i32_0 = arith.constant 0 : i32
    %c0_i32_1 = arith.constant 0 : i32
    return %c0_i32, %c0_i32_0 : i32, i32
  }
  func.func @transform_2(%arg0: i32) -> (i32, i32) {
    %c0_i32 = arith.constant 0 : i32
    %c0_i32_0 = arith.constant 0 : i32
    %c0_i32_1 = arith.constant 0 : i32
    return %c0_i32, %c0_i32_0 : i32, i32
  }
  func.func @transform_3(%arg0: i32) -> (i32, i32) {
    %c0_i32 = arith.constant 0 : i32
    %c0_i32_0 = arith.constant 0 : i32
    %c0_i32_1 = arith.constant 0 : i32
    return %c0_i32, %c0_i32_0 : i32, i32
  }
  func.func @transform_4(%arg0: i32) -> (i32, i32) {
    %c0_i32 = arith.constant 0 : i32
    %c0_i32_0 = arith.constant 0 : i32
    %c0_i32_1 = arith.constant 0 : i32
    return %c0_i32, %c0_i32_0 : i32, i32
  }
  func.func @transform_5(%arg0: i32) -> (i32, i32) {
    %c0_i32 = arith.constant 0 : i32
    %c0_i32_0 = arith.constant 0 : i32
    %c0_i32_1 = arith.constant 0 : i32
    return %c0_i32, %c0_i32_0 : i32, i32
  }
  func.func @transform_6(%arg0: i32) -> (i32, i32) {
    %c0_i32 = arith.constant 0 : i32
    %c0_i32_0 = arith.constant 0 : i32
    %c0_i32_1 = arith.constant 0 : i32
    return %c0_i32, %c0_i32_0 : i32, i32
  }
  func.func @transform_7(%arg0: i32) -> (i32, i32) {
    %c0_i32 = arith.constant 0 : i32
    %c0_i32_0 = arith.constant 0 : i32
    %c0_i32_1 = arith.constant 0 : i32
    return %c0_i32, %c0_i32_0 : i32, i32
  }
  func.func @transform_8(%arg0: i32) -> (i32, i32) {
    %c0_i32 = arith.constant 0 : i32
    %c0_i32_0 = arith.constant 0 : i32
    %c0_i32_1 = arith.constant 0 : i32
    return %c0_i32, %c0_i32_0 : i32, i32
  }
  func.func @transform_9(%arg0: i32) -> (i32, i32) {
    %c0_i32 = arith.constant 0 : i32
    %c0_i32_0 = arith.constant 0 : i32
    return %arg0, %c0_i32 : i32, i32
  }
}

</mosaic_0001>

<llo_original>
// kernel: tpu_custom_call.1
$region0: #{tpu_custom_call.1}
  #allocation0 [shape = 'u32[]', space=smem, size = 0x4, offset = 0x4, fixed_abs, tag = 'smem constant byte address 0x4 - core index']
  #allocation1 [shape = 'u32[144,128]{1,0:T(1,128)}', space=vmem, size = 0x12000, scoped, tag = 'internal scratch']
  %s0 = inlined_call_operand.vmem [shape: f32[64,80], index: 0, kind: input, shape index: {}]
  %s1 = inlined_call_operand.vmem [shape: f32[80,32], index: 1, kind: input, shape index: {}]
  %s2 = inlined_call_operand.vmem [shape: f32[1,32], index: 2, kind: input, shape index: {}]
  %s3 = inlined_call_operand.vmem [shape: f32[32,32], index: 3, kind: input, shape index: {}]
  %s4 = inlined_call_operand.vmem [shape: f32[1,32], index: 4, kind: input, shape index: {}]
  %s5 = inlined_call_operand.vmem [shape: f32[32,32], index: 5, kind: input, shape index: {}]
  %s6 = inlined_call_operand.vmem [shape: f32[1,32], index: 6, kind: input, shape index: {}]
  %s7 = inlined_call_operand.vmem [shape: f32[32,9], index: 7, kind: input, shape index: {}]
  %s8 = inlined_call_operand.vmem [shape: f32[1,9], index: 8, kind: input, shape index: {}]
  %s9 = inlined_call_operand.vmem [shape: f32[64,9], index: 9, kind: output, shape index: {}]
  %s10 = sld [smem:[#allocation0]]
  $region46: #{tpu_custom_call.1} parent=0
    _
  %s12 = ssub.s32 1, %s10
  %s13 = scalar_select 0, %s12, %s10
  // Predicated region
  $region2: #{tpu_custom_call.1} parent=0 // pred_check
    _
  $region3: #{tpu_custom_call.1} parent=0 // pred_check_branch
    %15 = sbr.rel (0) target = $region5
  $region4: #{tpu_custom_call.1} parent=0 // pred_region
    _
  $region5: #{tpu_custom_call.1} parent=0 // pred_fallthru
    _
  // Predicated region
  $region6: #{tpu_custom_call.1} parent=0 // pred_check
    _
  $region7: #{tpu_custom_call.1} parent=0 // pred_check_branch
    %17 = sbr.rel (0) target = $region9
  $region8: #{tpu_custom_call.1} parent=0 // pred_region
    _
  $region9: #{tpu_custom_call.1} parent=0 // pred_fallthru
    _
  // Predicated region
  $region10: #{tpu_custom_call.1} parent=0 // pred_check
    _
  $region11: #{tpu_custom_call.1} parent=0 // pred_check_branch
    %19 = sbr.rel (0) target = $region13
  $region12: #{tpu_custom_call.1} parent=0 // pred_region
    _
  $region13: #{tpu_custom_call.1} parent=0 // pred_fallthru
    _
  // Predicated region
  $region14: #{tpu_custom_call.1} parent=0 // pred_check
    _
  $region15: #{tpu_custom_call.1} parent=0 // pred_check_branch
    %21 = sbr.rel (0) target = $region17
  $region16: #{tpu_custom_call.1} parent=0 // pred_region
    _
  $region17: #{tpu_custom_call.1} parent=0 // pred_fallthru
    _
  // Predicated region
  $region18: #{tpu_custom_call.1} parent=0 // pred_check
    _
  $region19: #{tpu_custom_call.1} parent=0 // pred_check_branch
    %23 = sbr.rel (0) target = $region21
  $region20: #{tpu_custom_call.1} parent=0 // pred_region
    _
  $region21: #{tpu_custom_call.1} parent=0 // pred_fallthru
    _
  // Predicated region
  $region22: #{tpu_custom_call.1} parent=0 // pred_check
    _
  $region23: #{tpu_custom_call.1} parent=0 // pred_check_branch
    %25 = sbr.rel (0) target = $region25
  $region24: #{tpu_custom_call.1} parent=0 // pred_region
    _
  $region25: #{tpu_custom_call.1} parent=0 // pred_fallthru
    _
  // Predicated region
  $region26: #{tpu_custom_call.1} parent=0 // pred_check
    _
  $region27: #{tpu_custom_call.1} parent=0 // pred_check_branch
    %27 = sbr.rel (0) target = $region29
  $region28: #{tpu_custom_call.1} parent=0 // pred_region
    _
  $region29: #{tpu_custom_call.1} parent=0 // pred_fallthru
    _
  // Predicated region
  $region30: #{tpu_custom_call.1} parent=0 // pred_check
    _
  $region31: #{tpu_custom_call.1} parent=0 // pred_check_branch
    %29 = sbr.rel (0) target = $region33
  $region32: #{tpu_custom_call.1} parent=0 // pred_region
    _
  $region33: #{tpu_custom_call.1} parent=0 // pred_fallthru
    _
  // Predicated region
  $region34: #{tpu_custom_call.1} parent=0 // pred_check
    _
  $region35: #{tpu_custom_call.1} parent=0 // pred_check_branch
    %31 = sbr.rel (0) target = $region37
  $region36: #{tpu_custom_call.1} parent=0 // pred_region
    _
  $region37: #{tpu_custom_call.1} parent=0 // pred_fallthru
    _
  %v32 = vld [vmem:[%s0] sm:$0xff]
  %v33 = vld [vmem:[%s0 + $0x8] sm:$0xff]
  %v34 = vld [vmem:[%s0 + $0x10] sm:$0xff]
  %v35 = vld [vmem:[%s0 + $0x18] sm:$0xff]
  %v36 = vld [vmem:[%s0 + $0x20] sm:$0xff]
  %v37 = vld [vmem:[%s0 + $0x28] sm:$0xff]
  %v38 = vld [vmem:[%s0 + $0x30] sm:$0xff]
  %v39 = vld [vmem:[%s0 + $0x38] sm:$0xff]
  %v40 = vld [vmem:[%s1] sm:$0xff]
  %v41 = vld [vmem:[%s1 + $0x8] sm:$0xff]
  %v42 = vld [vmem:[%s1 + $0x10] sm:$0xff]
  %v43 = vld [vmem:[%s1 + $0x18] sm:$0xff]
  %v44 = vld [vmem:[%s1 + $0x20] sm:$0xff]
  %v45 = vld [vmem:[%s1 + $0x28] sm:$0xff]
  %v46 = vld [vmem:[%s1 + $0x30] sm:$0xff]
  %v47 = vld [vmem:[%s1 + $0x38] sm:$0xff]
  %v48 = vld [vmem:[%s1 + $0x40] sm:$0xff]
  %v49 = vld [vmem:[%s1 + $0x48] sm:$0xff]
  %v50 = vld [vmem:[%s2] sm:$0x1]
  %v52 = vlaneseq
  %v53 = vshrl.u32 %v52, 7
  %v54 = vsub.s32 0, %v53
  %v55 = vrot.slane %v50, %v54
  %vm57 = vcmask 654336
  %v59 = vsel %vm57, %v32, 0
  %v62 = vsel %vm57, %v33, 0
  %v65 = vsel %vm57, %v34, 0
  %v68 = vsel %vm57, %v35, 0
  %v71 = vsel %vm57, %v36, 0
  %v74 = vsel %vm57, %v37, 0
  %v77 = vsel %vm57, %v38, 0
  %v80 = vsel %vm57, %v39, 0
  %82 = vmatprep.subr.mxu0 0.0
  %83 = vmatpush1.msra.mxu0 0.0
  %84 = vmatprep.subr.mxu0 0.0
  %85 = vmatpush1.msra.mxu0 0.0
  %86 = vmatprep.subr.mxu0 0.0
  %87 = vmatpush1.msra.mxu0 0.0
  %88 = vmatprep.subr.mxu0 0.0
  %89 = vmatpush1.msra.mxu0 0.0
  %90 = vmatprep.subr.mxu0 0.0
  %91 = vmatpush1.msra.mxu0 0.0
  %92 = vmatprep.subr.mxu0 0.0
  %93 = vmatpush1.msra.mxu0 0.0
  %94 = vmatprep.subr.mxu0 0.0
  %95 = vmatpush1.msra.mxu0 %v49
  %96 = vmatprep.subr.mxu0 0.0
  %97 = vmatpush1.msra.mxu0 %v48
  %98 = vmatprep.subr.mxu0 0.0
  %99 = vmatpush1.msra.mxu0 %v47
  %100 = vmatprep.subr.mxu0 0.0
  %101 = vmatpush1.msra.mxu0 %v46
  %102 = vmatprep.subr.mxu0 0.0
  %103 = vmatpush1.msra.mxu0 %v45
  %104 = vmatprep.subr.mxu0 0.0
  %105 = vmatpush1.msra.mxu0 %v44
  %106 = vmatprep.subr.mxu0 0.0
  %107 = vmatpush1.msra.mxu0 %v43
  %108 = vmatprep.subr.mxu0 0.0
  %109 = vmatpush1.msra.mxu0 %v42
  %110 = vmatprep.subr.mxu0 0.0
  %111 = vmatpush1.msra.mxu0 %v41
  %112 = vmatprep.subr.mxu0 0.0
  %113 = vmatpush1.msra.mxu0 %v40
  %114 = vmatprep.subr.mxu0 0.0
  %115 = vmatpush2.msra.mxu0 0.0
  %116 = vmatprep.subr.mxu0 0.0
  %117 = vmatpush2.msra.mxu0 0.0
  %118 = vmatprep.subr.mxu0 0.0
  %119 = vmatpush2.msra.mxu0 0.0
  %120 = vmatprep.subr.mxu0 0.0
  %121 = vmatpush2.msra.mxu0 0.0
  %122 = vmatprep.subr.mxu0 0.0
  %123 = vmatpush2.msra.mxu0 0.0
  %124 = vmatprep.subr.mxu0 0.0
  %125 = vmatpush2.msra.mxu0 0.0
  %126 = vmatprep.subr.mxu0 0.0
  %127 = vmatpush2.msra.mxu0 0.0
  %128 = vmatprep.subr.mxu0 0.0
  %129 = vmatpush2.msra.mxu0 0.0
  %130 = vmatprep.subr.mxu0 0.0
  %131 = vmatpush2.msra.mxu0 0.0
  %132 = vmatprep.subr.mxu0 0.0
  %133 = vmatpush2.msra.mxu0 0.0
  %134 = vmatprep.subr.mxu0 0.0
  %135 = vmatpush2.msra.mxu0 0.0
  %136 = vmatprep.subr.mxu0 0.0
  %137 = vmatpush2.msra.mxu0 0.0
  %138 = vmatprep.subr.mxu0 0.0
  %139 = vmatpush2.msra.mxu0 0.0
  %140 = vmatprep.subr.mxu0 0.0
  %141 = vmatpush2.msra.mxu0 0.0
  %142 = vmatprep.subr.mxu0 0.0
  %143 = vmatpush2.msra.mxu0 0.0
  %144 = vmatprep.subr.mxu0 0.0
  %145 = vmatpush2.msra.mxu0 0.0
  %146 = vmatprep.mubr.f32.mxu0 0.0
  %147 = vmatmul.mubr.f32.gmra.mxu0 %v59
  %v148 = vpop.f32.mrf.mxu0
  %v149 = vadd.f32 %v55, %v148
  %v150 = vpop.f32.mrf.mxu0
  %151 = vmatprep.mubr.f32.mxu0 0.0
  %152 = vmatmul.mubr.f32.gmra.mxu0 %v62
  %v153 = vpop.f32.mrf.mxu0
  %v154 = vadd.f32 %v55, %v153
  %v155 = vpop.f32.mrf.mxu0
  %156 = vmatprep.mubr.f32.mxu0 0.0
  %157 = vmatmul.mubr.f32.gmra.mxu0 %v65
  %v158 = vpop.f32.mrf.mxu0
  %v159 = vadd.f32 %v55, %v158
  %v160 = vpop.f32.mrf.mxu0
  %161 = vmatprep.mubr.f32.mxu0 0.0
  %162 = vmatmul.mubr.f32.gmra.mxu0 %v68
  %v163 = vpop.f32.mrf.mxu0
  %v164 = vadd.f32 %v55, %v163
  %v165 = vpop.f32.mrf.mxu0
  %166 = vmatprep.mubr.f32.mxu0 0.0
  %167 = vmatmul.mubr.f32.gmra.mxu0 %v71
  %v168 = vpop.f32.mrf.mxu0
  %v169 = vadd.f32 %v55, %v168
  %v170 = vpop.f32.mrf.mxu0
  %171 = vmatprep.mubr.f32.mxu0 0.0
  %172 = vmatmul.mubr.f32.gmra.mxu0 %v74
  %v173 = vpop.f32.mrf.mxu0
  %v174 = vadd.f32 %v55, %v173
  %v175 = vpop.f32.mrf.mxu0
  %176 = vmatprep.mubr.f32.mxu0 0.0
  %177 = vmatmul.mubr.f32.gmra.mxu0 %v77
  %v178 = vpop.f32.mrf.mxu0
  %v179 = vadd.f32 %v55, %v178
  %v180 = vpop.f32.mrf.mxu0
  %181 = vmatprep.mubr.f32.mxu0 0.0
  %182 = vmatmul.mubr.f32.gmra.mxu0 %v80
  %v183 = vpop.f32.mrf.mxu0
  %v184 = vadd.f32 %v55, %v183
  %v185 = vpop.f32.mrf.mxu0
  %186 = vdwg.mxu0
  %v187 = vmax.f32 %v149, 0.0
  %v188 = vmax.f32 %v154, 0.0
  %v189 = vmax.f32 %v159, 0.0
  %v190 = vmax.f32 %v164, 0.0
  %v191 = vmax.f32 %v169, 0.0
  %v192 = vmax.f32 %v174, 0.0
  %v193 = vmax.f32 %v179, 0.0
  %v194 = vmax.f32 %v184, 0.0
  %v195 = vld [vmem:[%s3] sm:$0xff]
  %v196 = vld [vmem:[%s3 + $0x8] sm:$0xff]
  %v197 = vld [vmem:[%s3 + $0x10] sm:$0xff]
  %v198 = vld [vmem:[%s3 + $0x18] sm:$0xff]
  %v199 = vld [vmem:[%s4] sm:$0x1]
  %v201 = vlaneseq
  %v202 = vshrl.u32 %v201, 7
  %v203 = vsub.s32 0, %v202
  %v204 = vrot.slane %v199, %v203
  %vm206 = vcmask 261120
  %v208 = vsel %vm206, %v187, 0
  %v211 = vsel %vm206, %v188, 0
  %v214 = vsel %vm206, %v189, 0
  %v217 = vsel %vm206, %v190, 0
  %v220 = vsel %vm206, %v191, 0
  %v223 = vsel %vm206, %v192, 0
  %v226 = vsel %vm206, %v193, 0
  %v229 = vsel %vm206, %v194, 0
  %231 = vmatprep.subr.mxu0 0.0
  %232 = vmatpush1.msra.mxu0 0.0
  %233 = vmatprep.subr.mxu0 0.0
  %234 = vmatpush1.msra.mxu0 0.0
  %235 = vmatprep.subr.mxu0 0.0
  %236 = vmatpush1.msra.mxu0 0.0
  %237 = vmatprep.subr.mxu0 0.0
  %238 = vmatpush1.msra.mxu0 0.0
  %239 = vmatprep.subr.mxu0 0.0
  %240 = vmatpush1.msra.mxu0 0.0
  %241 = vmatprep.subr.mxu0 0.0
  %242 = vmatpush1.msra.mxu0 0.0
  %243 = vmatprep.subr.mxu0 0.0
  %244 = vmatpush1.msra.mxu0 0.0
  %245 = vmatprep.subr.mxu0 0.0
  %246 = vmatpush1.msra.mxu0 0.0
  %247 = vmatprep.subr.mxu0 0.0
  %248 = vmatpush1.msra.mxu0 0.0
  %249 = vmatprep.subr.mxu0 0.0
  %250 = vmatpush1.msra.mxu0 0.0
  %251 = vmatprep.subr.mxu0 0.0
  %252 = vmatpush1.msra.mxu0 0.0
  %253 = vmatprep.subr.mxu0 0.0
  %254 = vmatpush1.msra.mxu0 0.0
  %255 = vmatprep.subr.mxu0 0.0
  %256 = vmatpush1.msra.mxu0 %v198
  %257 = vmatprep.subr.mxu0 0.0
  %258 = vmatpush1.msra.mxu0 %v197
  %259 = vmatprep.subr.mxu0 0.0
  %260 = vmatpush1.msra.mxu0 %v196
  %261 = vmatprep.subr.mxu0 0.0
  %262 = vmatpush1.msra.mxu0 %v195
  %263 = vmatprep.subr.mxu0 0.0
  %264 = vmatpush2.msra.mxu0 0.0
  %265 = vmatprep.subr.mxu0 0.0
  %266 = vmatpush2.msra.mxu0 0.0
  %267 = vmatprep.subr.mxu0 0.0
  %268 = vmatpush2.msra.mxu0 0.0
  %269 = vmatprep.subr.mxu0 0.0
  %270 = vmatpush2.msra.mxu0 0.0
  %271 = vmatprep.subr.mxu0 0.0
  %272 = vmatpush2.msra.mxu0 0.0
  %273 = vmatprep.subr.mxu0 0.0
  %274 = vmatpush2.msra.mxu0 0.0
  %275 = vmatprep.subr.mxu0 0.0
  %276 = vmatpush2.msra.mxu0 0.0
  %277 = vmatprep.subr.mxu0 0.0
  %278 = vmatpush2.msra.mxu0 0.0
  %279 = vmatprep.subr.mxu0 0.0
  %280 = vmatpush2.msra.mxu0 0.0
  %281 = vmatprep.subr.mxu0 0.0
  %282 = vmatpush2.msra.mxu0 0.0
  %283 = vmatprep.subr.mxu0 0.0
  %284 = vmatpush2.msra.mxu0 0.0
  %285 = vmatprep.subr.mxu0 0.0
  %286 = vmatpush2.msra.mxu0 0.0
  %287 = vmatprep.subr.mxu0 0.0
  %288 = vmatpush2.msra.mxu0 0.0
  %289 = vmatprep.subr.mxu0 0.0
  %290 = vmatpush2.msra.mxu0 0.0
  %291 = vmatprep.subr.mxu0 0.0
  %292 = vmatpush2.msra.mxu0 0.0
  %293 = vmatprep.subr.mxu0 0.0
  %294 = vmatpush2.msra.mxu0 0.0
  %295 = vmatprep.mubr.f32.mxu0 0.0
  %296 = vmatmul.mubr.f32.gmra.mxu0 %v208
  %v297 = vpop.f32.mrf.mxu0
  %v298 = vadd.f32 %v204, %v297
  %v299 = vpop.f32.mrf.mxu0
  %300 = vmatprep.mubr.f32.mxu0 0.0
  %301 = vmatmul.mubr.f32.gmra.mxu0 %v211
  %v302 = vpop.f32.mrf.mxu0
  %v303 = vadd.f32 %v204, %v302
  %v304 = vpop.f32.mrf.mxu0
  %305 = vmatprep.mubr.f32.mxu0 0.0
  %306 = vmatmul.mubr.f32.gmra.mxu0 %v214
  %v307 = vpop.f32.mrf.mxu0
  %v308 = vadd.f32 %v204, %v307
  %v309 = vpop.f32.mrf.mxu0
  %310 = vmatprep.mubr.f32.mxu0 0.0
  %311 = vmatmul.mubr.f32.gmra.mxu0 %v217
  %v312 = vpop.f32.mrf.mxu0
  %v313 = vadd.f32 %v204, %v312
  %v314 = vpop.f32.mrf.mxu0
  %315 = vmatprep.mubr.f32.mxu0 0.0
  %316 = vmatmul.mubr.f32.gmra.mxu0 %v220
  %v317 = vpop.f32.mrf.mxu0
  %v318 = vadd.f32 %v204, %v317
  %v319 = vpop.f32.mrf.mxu0
  %320 = vmatprep.mubr.f32.mxu0 0.0
  %321 = vmatmul.mubr.f32.gmra.mxu0 %v223
  %v322 = vpop.f32.mrf.mxu0
  %v323 = vadd.f32 %v204, %v322
  %v324 = vpop.f32.mrf.mxu0
  %325 = vmatprep.mubr.f32.mxu0 0.0
  %326 = vmatmul.mubr.f32.gmra.mxu0 %v226
  %v327 = vpop.f32.mrf.mxu0
  %v328 = vadd.f32 %v204, %v327
  %v329 = vpop.f32.mrf.mxu0
  %330 = vmatprep.mubr.f32.mxu0 0.0
  %331 = vmatmul.mubr.f32.gmra.mxu0 %v229
  %v332 = vpop.f32.mrf.mxu0
  %v333 = vadd.f32 %v204, %v332
  %v334 = vpop.f32.mrf.mxu0
  %335 = vdwg.mxu0
  %v336 = vmax.f32 %v298, 0.0
  %v337 = vmax.f32 %v303, 0.0
  %v338 = vmax.f32 %v308, 0.0
  %v339 = vmax.f32 %v313, 0.0
  %v340 = vmax.f32 %v318, 0.0
  %v341 = vmax.f32 %v323, 0.0
  %v342 = vmax.f32 %v328, 0.0
  %v343 = vmax.f32 %v333, 0.0
  %v344 = vld [vmem:[%s5] sm:$0xff]
  %v345 = vld [vmem:[%s5 + $0x8] sm:$0xff]
  %v346 = vld [vmem:[%s5 + $0x10] sm:$0xff]
  %v347 = vld [vmem:[%s5 + $0x18] sm:$0xff]
  %v348 = vld [vmem:[%s6] sm:$0x1]
  %v350 = vlaneseq
  %v351 = vshrl.u32 %v350, 7
  %v352 = vsub.s32 0, %v351
  %v353 = vrot.slane %v348, %v352
  %v356 = vsel %vm206, %v336, 0
  %v359 = vsel %vm206, %v337, 0
  %v362 = vsel %vm206, %v338, 0
  %v365 = vsel %vm206, %v339, 0
  %v368 = vsel %vm206, %v340, 0
  %v371 = vsel %vm206, %v341, 0
  %v374 = vsel %vm206, %v342, 0
  %v377 = vsel %vm206, %v343, 0
  %379 = vmatprep.subr.mxu0 0.0
  %380 = vmatpush1.msra.mxu0 0.0
  %381 = vmatprep.subr.mxu0 0.0
  %382 = vmatpush1.msra.mxu0 0.0
  %383 = vmatprep.subr.mxu0 0.0
  %384 = vmatpush1.msra.mxu0 0.0
  %385 = vmatprep.subr.mxu0 0.0
  %386 = vmatpush1.msra.mxu0 0.0
  %387 = vmatprep.subr.mxu0 0.0
  %388 = vmatpush1.msra.mxu0 0.0
  %389 = vmatprep.subr.mxu0 0.0
  %390 = vmatpush1.msra.mxu0 0.0
  %391 = vmatprep.subr.mxu0 0.0
  %392 = vmatpush1.msra.mxu0 0.0
  %393 = vmatprep.subr.mxu0 0.0
  %394 = vmatpush1.msra.mxu0 0.0
  %395 = vmatprep.subr.mxu0 0.0
  %396 = vmatpush1.msra.mxu0 0.0
  %397 = vmatprep.subr.mxu0 0.0
  %398 = vmatpush1.msra.mxu0 0.0
  %399 = vmatprep.subr.mxu0 0.0
  %400 = vmatpush1.msra.mxu0 0.0
  %401 = vmatprep.subr.mxu0 0.0
  %402 = vmatpush1.msra.mxu0 0.0
  %403 = vmatprep.subr.mxu0 0.0
  %404 = vmatpush1.msra.mxu0 %v347
  %405 = vmatprep.subr.mxu0 0.0
  %406 = vmatpush1.msra.mxu0 %v346
  %407 = vmatprep.subr.mxu0 0.0
  %408 = vmatpush1.msra.mxu0 %v345
  %409 = vmatprep.subr.mxu0 0.0
  %410 = vmatpush1.msra.mxu0 %v344
  %411 = vmatprep.subr.mxu0 0.0
  %412 = vmatpush2.msra.mxu0 0.0
  %413 = vmatprep.subr.mxu0 0.0
  %414 = vmatpush2.msra.mxu0 0.0
  %415 = vmatprep.subr.mxu0 0.0
  %416 = vmatpush2.msra.mxu0 0.0
  %417 = vmatprep.subr.mxu0 0.0
  %418 = vmatpush2.msra.mxu0 0.0
  %419 = vmatprep.subr.mxu0 0.0
  %420 = vmatpush2.msra.mxu0 0.0
  %421 = vmatprep.subr.mxu0 0.0
  %422 = vmatpush2.msra.mxu0 0.0
  %423 = vmatprep.subr.mxu0 0.0
  %424 = vmatpush2.msra.mxu0 0.0
  %425 = vmatprep.subr.mxu0 0.0
  %426 = vmatpush2.msra.mxu0 0.0
  %427 = vmatprep.subr.mxu0 0.0
  %428 = vmatpush2.msra.mxu0 0.0
  %429 = vmatprep.subr.mxu0 0.0
  %430 = vmatpush2.msra.mxu0 0.0
  %431 = vmatprep.subr.mxu0 0.0
  %432 = vmatpush2.msra.mxu0 0.0
  %433 = vmatprep.subr.mxu0 0.0
  %434 = vmatpush2.msra.mxu0 0.0
  %435 = vmatprep.subr.mxu0 0.0
  %436 = vmatpush2.msra.mxu0 0.0
  %437 = vmatprep.subr.mxu0 0.0
  %438 = vmatpush2.msra.mxu0 0.0
  %439 = vmatprep.subr.mxu0 0.0
  %440 = vmatpush2.msra.mxu0 0.0
  %441 = vmatprep.subr.mxu0 0.0
  %442 = vmatpush2.msra.mxu0 0.0
  %443 = vmatprep.mubr.f32.mxu0 0.0
  %444 = vmatmul.mubr.f32.gmra.mxu0 %v356
  %v445 = vpop.f32.mrf.mxu0
  %v446 = vadd.f32 %v353, %v445
  %v447 = vpop.f32.mrf.mxu0
  %448 = vmatprep.mubr.f32.mxu0 0.0
  %449 = vmatmul.mubr.f32.gmra.mxu0 %v359
  %v450 = vpop.f32.mrf.mxu0
  %v451 = vadd.f32 %v353, %v450
  %v452 = vpop.f32.mrf.mxu0
  %453 = vmatprep.mubr.f32.mxu0 0.0
  %454 = vmatmul.mubr.f32.gmra.mxu0 %v362
  %v455 = vpop.f32.mrf.mxu0
  %v456 = vadd.f32 %v353, %v455
  %v457 = vpop.f32.mrf.mxu0
  %458 = vmatprep.mubr.f32.mxu0 0.0
  %459 = vmatmul.mubr.f32.gmra.mxu0 %v365
  %v460 = vpop.f32.mrf.mxu0
  %v461 = vadd.f32 %v353, %v460
  %v462 = vpop.f32.mrf.mxu0
  %463 = vmatprep.mubr.f32.mxu0 0.0
  %464 = vmatmul.mubr.f32.gmra.mxu0 %v368
  %v465 = vpop.f32.mrf.mxu0
  %v466 = vadd.f32 %v353, %v465
  %v467 = vpop.f32.mrf.mxu0
  %468 = vmatprep.mubr.f32.mxu0 0.0
  %469 = vmatmul.mubr.f32.gmra.mxu0 %v371
  %v470 = vpop.f32.mrf.mxu0
  %v471 = vadd.f32 %v353, %v470
  %v472 = vpop.f32.mrf.mxu0
  %473 = vmatprep.mubr.f32.mxu0 0.0
  %474 = vmatmul.mubr.f32.gmra.mxu0 %v374
  %v475 = vpop.f32.mrf.mxu0
  %v476 = vadd.f32 %v353, %v475
  %v477 = vpop.f32.mrf.mxu0
  %478 = vmatprep.mubr.f32.mxu0 0.0
  %479 = vmatmul.mubr.f32.gmra.mxu0 %v377
  %v480 = vpop.f32.mrf.mxu0
  %v481 = vadd.f32 %v353, %v480
  %v482 = vpop.f32.mrf.mxu0
  %483 = vdwg.mxu0
  %v484 = vmax.f32 %v446, 0.0
  %v485 = vmax.f32 %v451, 0.0
  %v486 = vmax.f32 %v456, 0.0
  %v487 = vmax.f32 %v461, 0.0
  %v488 = vmax.f32 %v466, 0.0
  %v489 = vmax.f32 %v471, 0.0
  %v490 = vmax.f32 %v476, 0.0
  %v491 = vmax.f32 %v481, 0.0
  %v492 = vld [vmem:[%s7] sm:$0xff]
  %v493 = vld [vmem:[%s7 + $0x8] sm:$0xff]
  %v494 = vld [vmem:[%s7 + $0x10] sm:$0xff]
  %v495 = vld [vmem:[%s7 + $0x18] sm:$0xff]
  %v496 = vld [vmem:[%s8] sm:$0x1]
  %v498 = vlaneseq
  %v499 = vshrl.u32 %v498, 7
  %v500 = vsub.s32 0, %v499
  %v501 = vrot.slane %v496, %v500
  %v504 = vsel %vm206, %v484, 0
  %v507 = vsel %vm206, %v485, 0
  %v510 = vsel %vm206, %v486, 0
  %v513 = vsel %vm206, %v487, 0
  %v516 = vsel %vm206, %v488, 0
  %v519 = vsel %vm206, %v489, 0
  %v522 = vsel %vm206, %v490, 0
  %v525 = vsel %vm206, %v491, 0
  %527 = vmatprep.subr.mxu0 0.0
  %528 = vmatpush1.msra.mxu0 0.0
  %529 = vmatprep.subr.mxu0 0.0
  %530 = vmatpush1.msra.mxu0 0.0
  %531 = vmatprep.subr.mxu0 0.0
  %532 = vmatpush1.msra.mxu0 0.0
  %533 = vmatprep.subr.mxu0 0.0
  %534 = vmatpush1.msra.mxu0 0.0
  %535 = vmatprep.subr.mxu0 0.0
  %536 = vmatpush1.msra.mxu0 0.0
  %537 = vmatprep.subr.mxu0 0.0
  %538 = vmatpush1.msra.mxu0 0.0
  %539 = vmatprep.subr.mxu0 0.0
  %540 = vmatpush1.msra.mxu0 0.0
  %541 = vmatprep.subr.mxu0 0.0
  %542 = vmatpush1.msra.mxu0 0.0
  %543 = vmatprep.subr.mxu0 0.0
  %544 = vmatpush1.msra.mxu0 0.0
  %545 = vmatprep.subr.mxu0 0.0
  %546 = vmatpush1.msra.mxu0 0.0
  %547 = vmatprep.subr.mxu0 0.0
  %548 = vmatpush1.msra.mxu0 0.0
  %549 = vmatprep.subr.mxu0 0.0
  %550 = vmatpush1.msra.mxu0 0.0
  %551 = vmatprep.subr.mxu0 0.0
  %552 = vmatpush1.msra.mxu0 %v495
  %553 = vmatprep.subr.mxu0 0.0
  %554 = vmatpush1.msra.mxu0 %v494
  %555 = vmatprep.subr.mxu0 0.0
  %556 = vmatpush1.msra.mxu0 %v493
  %557 = vmatprep.subr.mxu0 0.0
  %558 = vmatpush1.msra.mxu0 %v492
  %559 = vmatprep.subr.mxu0 0.0
  %560 = vmatpush2.msra.mxu0 0.0
  %561 = vmatprep.subr.mxu0 0.0
  %562 = vmatpush2.msra.mxu0 0.0
  %563 = vmatprep.subr.mxu0 0.0
  %564 = vmatpush2.msra.mxu0 0.0
  %565 = vmatprep.subr.mxu0 0.0
  %566 = vmatpush2.msra.mxu0 0.0
  %567 = vmatprep.subr.mxu0 0.0
  %568 = vmatpush2.msra.mxu0 0.0
  %569 = vmatprep.subr.mxu0 0.0
  %570 = vmatpush2.msra.mxu0 0.0
  %571 = vmatprep.subr.mxu0 0.0
  %572 = vmatpush2.msra.mxu0 0.0
  %573 = vmatprep.subr.mxu0 0.0
  %574 = vmatpush2.msra.mxu0 0.0
  %575 = vmatprep.subr.mxu0 0.0
  %576 = vmatpush2.msra.mxu0 0.0
  %577 = vmatprep.subr.mxu0 0.0
  %578 = vmatpush2.msra.mxu0 0.0
  %579 = vmatprep.subr.mxu0 0.0
  %580 = vmatpush2.msra.mxu0 0.0
  %581 = vmatprep.subr.mxu0 0.0
  %582 = vmatpush2.msra.mxu0 0.0
  %583 = vmatprep.subr.mxu0 0.0
  %584 = vmatpush2.msra.mxu0 0.0
  %585 = vmatprep.subr.mxu0 0.0
  %586 = vmatpush2.msra.mxu0 0.0
  %587 = vmatprep.subr.mxu0 0.0
  %588 = vmatpush2.msra.mxu0 0.0
  %589 = vmatprep.subr.mxu0 0.0
  %590 = vmatpush2.msra.mxu0 0.0
  %591 = vmatprep.mubr.f32.mxu0 0.0
  %592 = vmatmul.mubr.f32.gmra.mxu0 %v504
  %v593 = vpop.f32.mrf.mxu0
  %v594 = vadd.f32 %v501, %v593
  %v595 = vpop.f32.mrf.mxu0
  %596 = vmatprep.mubr.f32.mxu0 0.0
  %597 = vmatmul.mubr.f32.gmra.mxu0 %v507
  %v598 = vpop.f32.mrf.mxu0
  %v599 = vadd.f32 %v501, %v598
  %v600 = vpop.f32.mrf.mxu0
  %601 = vmatprep.mubr.f32.mxu0 0.0
  %602 = vmatmul.mubr.f32.gmra.mxu0 %v510
  %v603 = vpop.f32.mrf.mxu0
  %v604 = vadd.f32 %v501, %v603
  %v605 = vpop.f32.mrf.mxu0
  %606 = vmatprep.mubr.f32.mxu0 0.0
  %607 = vmatmul.mubr.f32.gmra.mxu0 %v513
  %v608 = vpop.f32.mrf.mxu0
  %v609 = vadd.f32 %v501, %v608
  %v610 = vpop.f32.mrf.mxu0
  %611 = vmatprep.mubr.f32.mxu0 0.0
  %612 = vmatmul.mubr.f32.gmra.mxu0 %v516
  %v613 = vpop.f32.mrf.mxu0
  %v614 = vadd.f32 %v501, %v613
  %v615 = vpop.f32.mrf.mxu0
  %616 = vmatprep.mubr.f32.mxu0 0.0
  %617 = vmatmul.mubr.f32.gmra.mxu0 %v519
  %v618 = vpop.f32.mrf.mxu0
  %v619 = vadd.f32 %v501, %v618
  %v620 = vpop.f32.mrf.mxu0
  %621 = vmatprep.mubr.f32.mxu0 0.0
  %622 = vmatmul.mubr.f32.gmra.mxu0 %v522
  %v623 = vpop.f32.mrf.mxu0
  %v624 = vadd.f32 %v501, %v623
  %v625 = vpop.f32.mrf.mxu0
  %626 = vmatprep.mubr.f32.mxu0 0.0
  %627 = vmatmul.mubr.f32.gmra.mxu0 %v525
  %v628 = vpop.f32.mrf.mxu0
  %v629 = vadd.f32 %v501, %v628
  %v630 = vpop.f32.mrf.mxu0
  %631 = vdwg.mxu0
  %vm632 = vcmask 72704
  %633 = vst.msk [vmem:[%s9] sm:$0xff] %vm632, %v594
  %634 = vst.msk [vmem:[%s9 + $0x8] sm:$0xff] %vm632, %v599
  %635 = vst.msk [vmem:[%s9 + $0x10] sm:$0xff] %vm632, %v604
  %636 = vst.msk [vmem:[%s9 + $0x18] sm:$0xff] %vm632, %v609
  %637 = vst.msk [vmem:[%s9 + $0x20] sm:$0xff] %vm632, %v614
  %638 = vst.msk [vmem:[%s9 + $0x28] sm:$0xff] %vm632, %v619
  %639 = vst.msk [vmem:[%s9 + $0x30] sm:$0xff] %vm632, %v624
  %640 = vst.msk [vmem:[%s9 + $0x38] sm:$0xff] %vm632, %v629
  // Predicated region
  $region38: #{tpu_custom_call.1} parent=0 // pred_check
    _
  $region39: #{tpu_custom_call.1} parent=0 // pred_check_branch
    %642 = sbr.rel (0) target = $region41
  $region40: #{tpu_custom_call.1} parent=0 // pred_region
    _
  $region41: #{tpu_custom_call.1} parent=0 // pred_fallthru
    _
  // Predicated region
  $region42: #{tpu_custom_call.1} parent=0 // pred_check
    _
  $region43: #{tpu_custom_call.1} parent=0 // pred_check_branch
    %644 = sbr.rel (0) target = $region45
  $region44: #{tpu_custom_call.1} parent=0 // pred_region
    _
  $region45: #{tpu_custom_call.1} parent=0 // pred_fallthru
    _

</llo_original>
